<compile_context>
chip_gen: v6e
topology: v6e:2x2x1
jax: 0.10.0
libtpu: 0.0.40
codegen_flags: <defaults>
</compile_context>

<pallas_src>
import functools

import jax
import jax.numpy as jnp
from jax.experimental import pallas as pl
from jax.experimental.pallas import tpu as pltpu


def _round_up(n, m):
    return ((n + m - 1) // m) * m


def pack_params(params, F, A, H, L1, L2, O):
    """Pack all weights (pre-transposed to (in, out)) and biases into ONE
    (rows, COLS) f32 buffer.  Every block starts on an 8-row boundary so the
    in-kernel static slices stay sublane-tile aligned.  Returns the packed
    buffer and a static {name: (row_offset, rows, cols)} layout dict."""
    COLS = max(H, L1, L2, O)
    mats = {
        "wih": params["w_ih"].T,        # (F,  H)   input -> hidden
        "whh": params["w_hh"].T,        # (H,  H)   hidden -> hidden
        "w1h": params["w1"][:, :H].T,   # (H,  L1)  hidden1, rnn part
        "w1a": params["w1"][:, H:].T,   # (A,  L1)  hidden1, aux part
        "w2":  params["w2"].T,          # (L1, L2)
        "w3":  params["w3"].T,          # (L2, O)
    }
    bias_blk = jnp.zeros((8, COLS), jnp.float32)
    bias_blk = bias_blk.at[0, :H].set(params["b_ih"] + params["b_hh"])
    bias_blk = bias_blk.at[1, :L1].set(params["b1"])
    bias_blk = bias_blk.at[2, :L2].set(params["b2"])
    bias_blk = bias_blk.at[3, :O].set(params["b3"])

    blocks, layout, off = [], {}, 0
    for name, m in mats.items():
        r, c = m.shape
        rp = _round_up(r, 8)
        blocks.append(jnp.pad(m.astype(jnp.float32),
                              ((0, rp - r), (0, COLS - c))))
        layout[name] = (off, r, c)
        off += rp
    layout["bias"] = (off, 4, COLS)
    blocks.append(bias_blk)
    packed = jnp.concatenate(blocks, axis=0)    # (off + 8, COLS)
    return packed, layout


def rnn_mlp_kernel(B, T, F, A, H, L1, L2, O, layout,
                   x_ref,      # (T*B, F)  time-major rows (t*B + b)
                   aux_ref,    # (B, A)
                   p_ref,      # packed params (rows, 32)
                   out_ref):   # (B, O)
    def w(name):
        off, r, c = layout[name]
        return p_ref[off:off + r, 0:c]

    boff = layout["bias"][0]
    brnn = p_ref[boff + 0:boff + 1, 0:H]    # (1, H)  b_ih + b_hh
    b1 = p_ref[boff + 1:boff + 2, 0:L1]
    b2 = p_ref[boff + 2:boff + 3, 0:L2]
    b3 = p_ref[boff + 3:boff + 4, 0:O]

    # --- Hoisted input projection: ONE (T*B, F) @ (F, H) matmul + fused bias,
    #     off the serial dependency chain; kept as a value (no scratch). ------
    pre = (jnp.dot(x_ref[...], w("wih"), preferred_element_type=jnp.float32)
           + brnn)                                        # (T*B, H)

    # --- Serial recurrence: h_t = relu(pre[t] + h_{t-1} @ Whh) ---------------
    # Time-major pre: timestep t is the contiguous, 8-sublane-aligned block
    # rows [t*B, (t+1)*B).  h0 == 0 => step 0 skips the h @ Whh matmul.
    # TODO(synk): if the Mosaic dump shows the (H,H) RHS being re-staged into
    # the MXU every step, switch to explicit pltpu.matmul_push_rhs /
    # matmul_acc_lhs / matmul_pop to keep Whh weight-stationary.
    whh = w("whh")                     # loaded once, stays live across the loop
    h = jnp.maximum(pre[0:B, :], 0.0)
    for t in range(1, T):              # fully unrolled: T static and small
        h = jnp.maximum(
            pre[t * B:(t + 1) * B, :]
            + jnp.dot(h, whh, preferred_element_type=jnp.float32),
            0.0)

    # --- MLP head; concat([h_last, aux]) realized via split-weight dots ------
    h1 = jnp.maximum(
        jnp.dot(h, w("w1h"), preferred_element_type=jnp.float32)
        + jnp.dot(aux_ref[...], w("w1a"), preferred_element_type=jnp.float32)
        + b1, 0.0)
    h2 = jnp.maximum(
        jnp.dot(h1, w("w2"), preferred_element_type=jnp.float32) + b2, 0.0)
    out = jnp.dot(h2, w("w3"), preferred_element_type=jnp.float32) + b3
    out_ref[...] = out.astype(out_ref.dtype)


def rnn_forward(x_main, x_aux, params):
    """x_main: (B, T, F) batch-first (PyTorch convention); x_aux: (B, A)."""
    B, T, F = x_main.shape
    A = x_aux.shape[1]
    H = params["w_ih"].shape[0]
    L1 = params["w1"].shape[0]
    L2 = params["w2"].shape[0]
    O = params["w3"].shape[0]

    # Time-major X so each timestep of the hoisted pre-activations is a
    # contiguous, aligned (B, H) tile (the 4 KiB transpose is noise).
    x_tm = jnp.transpose(x_main, (1, 0, 2)).reshape(T * B, F)
    packed, layout = pack_params(params, F, A, H, L1, L2, O)

    vmem = pl.BlockSpec(memory_space=pltpu.MemorySpace.VMEM)

    flops = (2 * T * B * F * H                 # hoisted input projection
             + 2 * (T - 1) * B * H * H         # recurrence
             + 2 * B * (H * L1 + A * L1 + L1 * L2 + L2 * O))   # MLP head
    bytes_accessed = 4 * (x_tm.size + x_aux.size + packed.size + B * O)

    # TODO(synk): when B/T scale up, add grid=(pl.cdiv(B, TB),) with
    # dimension_semantics=("parallel",) to shard the (T-serial, B-parallel)
    # recurrence across v7x's two TensorCores, size TB against the 64 MiB
    # VMEM, and consider bf16 operands on v6e/v7x.  At these tiny eval shapes
    # one gridless, fully-resident, 3-input invocation is cheapest.
    return pl.pallas_call(
        functools.partial(rnn_mlp_kernel, B, T, F, A, H, L1, L2, O, layout),
        out_shape=jax.ShapeDtypeStruct((B, O), jnp.float32),
        in_specs=[vmem, vmem, vmem],
        out_specs=vmem,
        cost_estimate=pl.CostEstimate(flops=flops, transcendentals=0,
                                      bytes_accessed=bytes_accessed),
    )(x_tm, x_aux, packed)


def reference_forward(x_main, x_aux, p):
    """Pure-JAX reference mirroring the PyTorch forward (for verification)."""
    B, T, F = x_main.shape
    H = p["w_ih"].shape[0]
    h = jnp.zeros((B, H), jnp.float32)
    for t in range(T):
        h = jnp.maximum(
            x_main[:, t, :] @ p["w_ih"].T + p["b_ih"]
            + h @ p["w_hh"].T + p["b_hh"], 0.0)
    cat = jnp.concatenate([h, x_aux], axis=1)
    h1 = jnp.maximum(cat @ p["w1"].T + p["b1"], 0.0)
    h2 = jnp.maximum(h1 @ p["w2"].T + p["b2"], 0.0)
    return h2 @ p["w3"].T + p["b3"]


def init_params(key, F, A, H, L1, L2, O):
    """Deterministic PyTorch-shaped params (uniform(-1/sqrt(fan_in), ...))."""
    ks = jax.random.split(key, 10)

    def u(k, shape, fan):
        bound = 1.0 / jnp.sqrt(fan)
        return jax.random.uniform(k, shape, jnp.float32, -bound, bound)

    return {
        "w_ih": u(ks[0], (H, F), H),
        "w_hh": u(ks[1], (H, H), H),
        "b_ih": u(ks[2], (H,), H),
        "b_hh": u(ks[3], (H,), H),
        "w1": u(ks[4], (L1, H + A), H + A),
        "b1": u(ks[5], (L1,), H + A),
        "w2": u(ks[6], (L2, L1), L1),
        "b2": u(ks[7], (L2,), L1),
        "w3": u(ks[8], (O, L2), L2),
        "b3": u(ks[9], (O,), L2),
    }


if __name__ == "__main__":
    # Module hyperparams: RNN_nodes=32, linear_nodes=32, input_size=(16, 8),
    # n_output_vars=4; dropout inactive in this forward.
    B, T = 8, 8
    F, A = 16, 8           # input_size = (F, A)
    H = 32                 # RNN_nodes
    L1 = 32                # linear_nodes
    L2 = L1 // 2
    O = 4                  # n_output_vars

    key = jax.random.PRNGKey(0)
    k_xm, k_xa, k_p = jax.random.split(key, 3)
    x_main = jax.random.normal(k_xm, (B, T, F), jnp.float32)
    x_aux = jax.random.normal(k_xa, (B, A), jnp.float32)
    params = init_params(k_p, F, A, H, L1, L2, O)

    out = jax.block_until_ready(rnn_forward(x_main, x_aux, params))
    ref = reference_forward(x_main, x_aux, params)

    assert out.shape == (B, O)
    assert jnp.allclose(out, ref, atol=1e-4, rtol=1e-4), "mismatch vs reference"
    print("KERNEL_OK")
</pallas_src>

<mosaic_0001>
module attributes {stable_mosaic.version = 11 : i64} {
  func.func @rnn_mlp_kernel(%arg0: memref<64x16xf32, #tpu.memory_space<vmem>>, %arg1: memref<8x8xf32, #tpu.memory_space<vmem>>, %arg2: memref<144x32xf32, #tpu.memory_space<vmem>>, %arg3: memref<8x4xf32, #tpu.memory_space<vmem>>) attributes {dimension_semantics = [], scalar_prefetch = 0 : i64, scratch_operands = 0 : i64, tpu.core_type = #tpu.core_type<tc>} {
    %c136 = arith.constant 136 : index
    %c0 = arith.constant 0 : index
    %0 = vector.load %arg2[%c136, %c0] : memref<144x32xf32, #tpu.memory_space<vmem>>, vector<1x32xf32>
    %c137 = arith.constant 137 : index
    %c0_0 = arith.constant 0 : index
    %1 = vector.load %arg2[%c137, %c0_0] : memref<144x32xf32, #tpu.memory_space<vmem>>, vector<1x32xf32>
    %c138 = arith.constant 138 : index
    %c0_1 = arith.constant 0 : index
    %2 = vector.load %arg2[%c138, %c0_1] : memref<144x32xf32, #tpu.memory_space<vmem>>, vector<1x16xf32>
    %c139 = arith.constant 139 : index
    %c0_2 = arith.constant 0 : index
    %3 = vector.load %arg2[%c139, %c0_2] : memref<144x32xf32, #tpu.memory_space<vmem>>, vector<1x4xf32>
    %c0_3 = arith.constant 0 : index
    %c0_4 = arith.constant 0 : index
    %4 = vector.load %arg0[%c0_3, %c0_4] : memref<64x16xf32, #tpu.memory_space<vmem>>, vector<64x16xf32>
    %c0_5 = arith.constant 0 : index
    %c0_6 = arith.constant 0 : index
    %5 = vector.load %arg2[%c0_5, %c0_6] : memref<144x32xf32, #tpu.memory_space<vmem>>, vector<16x32xf32>
    %cst = arith.constant dense<0.000000e+00> : vector<64x32xf32>
    %6 = tpu.matmul %4, %5, %cst {dimension_numbers = #tpu.dot_dimension_numbers<[1], [0], [0], [1], [0, 0, 1, 1], [], []>} : vector<64x16xf32>, vector<16x32xf32>, vector<64x32xf32> -> vector<64x32xf32>
    %7 = vector.broadcast %0 : vector<1x32xf32> to vector<64x32xf32>
    %8 = arith.addf %6, %7 : vector<64x32xf32>
    %c16 = arith.constant 16 : index
    %c0_7 = arith.constant 0 : index
    %9 = vector.load %arg2[%c16, %c0_7] : memref<144x32xf32, #tpu.memory_space<vmem>>, vector<32x32xf32>
    %10 = vector.extract_strided_slice %8 {offsets = [0, 0], sizes = [8, 32], strides = [1, 1]} : vector<64x32xf32> to vector<8x32xf32>
    %cst_8 = arith.constant 0.000000e+00 : f32
    %11 = vector.broadcast %cst_8 : f32 to vector<8x32xf32>
    %12 = arith.maximumf %10, %11 : vector<8x32xf32>
    %13 = vector.extract_strided_slice %8 {offsets = [8, 0], sizes = [8, 32], strides = [1, 1]} : vector<64x32xf32> to vector<8x32xf32>
    %cst_9 = arith.constant dense<0.000000e+00> : vector<8x32xf32>
    %14 = tpu.matmul %12, %9, %cst_9 {dimension_numbers = #tpu.dot_dimension_numbers<[1], [0], [0], [1], [0, 0, 1, 1], [], []>} : vector<8x32xf32>, vector<32x32xf32>, vector<8x32xf32> -> vector<8x32xf32>
    %15 = arith.addf %13, %14 : vector<8x32xf32>
    %cst_10 = arith.constant 0.000000e+00 : f32
    %16 = vector.broadcast %cst_10 : f32 to vector<8x32xf32>
    %17 = arith.maximumf %15, %16 : vector<8x32xf32>
    %18 = vector.extract_strided_slice %8 {offsets = [16, 0], sizes = [8, 32], strides = [1, 1]} : vector<64x32xf32> to vector<8x32xf32>
    %cst_11 = arith.constant dense<0.000000e+00> : vector<8x32xf32>
    %19 = tpu.matmul %17, %9, %cst_11 {dimension_numbers = #tpu.dot_dimension_numbers<[1], [0], [0], [1], [0, 0, 1, 1], [], []>} : vector<8x32xf32>, vector<32x32xf32>, vector<8x32xf32> -> vector<8x32xf32>
    %20 = arith.addf %18, %19 : vector<8x32xf32>
    %cst_12 = arith.constant 0.000000e+00 : f32
    %21 = vector.broadcast %cst_12 : f32 to vector<8x32xf32>
    %22 = arith.maximumf %20, %21 : vector<8x32xf32>
    %23 = vector.extract_strided_slice %8 {offsets = [24, 0], sizes = [8, 32], strides = [1, 1]} : vector<64x32xf32> to vector<8x32xf32>
    %cst_13 = arith.constant dense<0.000000e+00> : vector<8x32xf32>
    %24 = tpu.matmul %22, %9, %cst_13 {dimension_numbers = #tpu.dot_dimension_numbers<[1], [0], [0], [1], [0, 0, 1, 1], [], []>} : vector<8x32xf32>, vector<32x32xf32>, vector<8x32xf32> -> vector<8x32xf32>
    %25 = arith.addf %23, %24 : vector<8x32xf32>
    %cst_14 = arith.constant 0.000000e+00 : f32
    %26 = vector.broadcast %cst_14 : f32 to vector<8x32xf32>
    %27 = arith.maximumf %25, %26 : vector<8x32xf32>
    %28 = vector.extract_strided_slice %8 {offsets = [32, 0], sizes = [8, 32], strides = [1, 1]} : vector<64x32xf32> to vector<8x32xf32>
    %cst_15 = arith.constant dense<0.000000e+00> : vector<8x32xf32>
    %29 = tpu.matmul %27, %9, %cst_15 {dimension_numbers = #tpu.dot_dimension_numbers<[1], [0], [0], [1], [0, 0, 1, 1], [], []>} : vector<8x32xf32>, vector<32x32xf32>, vector<8x32xf32> -> vector<8x32xf32>
    %30 = arith.addf %28, %29 : vector<8x32xf32>
    %cst_16 = arith.constant 0.000000e+00 : f32
    %31 = vector.broadcast %cst_16 : f32 to vector<8x32xf32>
    %32 = arith.maximumf %30, %31 : vector<8x32xf32>
    %33 = vector.extract_strided_slice %8 {offsets = [40, 0], sizes = [8, 32], strides = [1, 1]} : vector<64x32xf32> to vector<8x32xf32>
    %cst_17 = arith.constant dense<0.000000e+00> : vector<8x32xf32>
    %34 = tpu.matmul %32, %9, %cst_17 {dimension_numbers = #tpu.dot_dimension_numbers<[1], [0], [0], [1], [0, 0, 1, 1], [], []>} : vector<8x32xf32>, vector<32x32xf32>, vector<8x32xf32> -> vector<8x32xf32>
    %35 = arith.addf %33, %34 : vector<8x32xf32>
    %cst_18 = arith.constant 0.000000e+00 : f32
    %36 = vector.broadcast %cst_18 : f32 to vector<8x32xf32>
    %37 = arith.maximumf %35, %36 : vector<8x32xf32>
    %38 = vector.extract_strided_slice %8 {offsets = [48, 0], sizes = [8, 32], strides = [1, 1]} : vector<64x32xf32> to vector<8x32xf32>
    %cst_19 = arith.constant dense<0.000000e+00> : vector<8x32xf32>
    %39 = tpu.matmul %37, %9, %cst_19 {dimension_numbers = #tpu.dot_dimension_numbers<[1], [0], [0], [1], [0, 0, 1, 1], [], []>} : vector<8x32xf32>, vector<32x32xf32>, vector<8x32xf32> -> vector<8x32xf32>
    %40 = arith.addf %38, %39 : vector<8x32xf32>
    %cst_20 = arith.constant 0.000000e+00 : f32
    %41 = vector.broadcast %cst_20 : f32 to vector<8x32xf32>
    %42 = arith.maximumf %40, %41 : vector<8x32xf32>
    %43 = vector.extract_strided_slice %8 {offsets = [56, 0], sizes = [8, 32], strides = [1, 1]} : vector<64x32xf32> to vector<8x32xf32>
    %cst_21 = arith.constant dense<0.000000e+00> : vector<8x32xf32>
    %44 = tpu.matmul %42, %9, %cst_21 {dimension_numbers = #tpu.dot_dimension_numbers<[1], [0], [0], [1], [0, 0, 1, 1], [], []>} : vector<8x32xf32>, vector<32x32xf32>, vector<8x32xf32> -> vector<8x32xf32>
    %45 = arith.addf %43, %44 : vector<8x32xf32>
    %cst_22 = arith.constant 0.000000e+00 : f32
    %46 = vector.broadcast %cst_22 : f32 to vector<8x32xf32>
    %47 = arith.maximumf %45, %46 : vector<8x32xf32>
    %c48 = arith.constant 48 : index
    %c0_23 = arith.constant 0 : index
    %48 = vector.load %arg2[%c48, %c0_23] : memref<144x32xf32, #tpu.memory_space<vmem>>, vector<32x32xf32>
    %cst_24 = arith.constant dense<0.000000e+00> : vector<8x32xf32>
    %49 = tpu.matmul %47, %48, %cst_24 {dimension_numbers = #tpu.dot_dimension_numbers<[1], [0], [0], [1], [0, 0, 1, 1], [], []>} : vector<8x32xf32>, vector<32x32xf32>, vector<8x32xf32> -> vector<8x32xf32>
    %c0_25 = arith.constant 0 : index
    %c0_26 = arith.constant 0 : index
    %50 = vector.load %arg1[%c0_25, %c0_26] : memref<8x8xf32, #tpu.memory_space<vmem>>, vector<8x8xf32>
    %c80 = arith.constant 80 : index
    %c0_27 = arith.constant 0 : index
    %51 = vector.load %arg2[%c80, %c0_27] : memref<144x32xf32, #tpu.memory_space<vmem>>, vector<8x32xf32>
    %cst_28 = arith.constant dense<0.000000e+00> : vector<8x32xf32>
    %52 = tpu.matmul %50, %51, %cst_28 {dimension_numbers = #tpu.dot_dimension_numbers<[1], [0], [0], [1], [0, 0, 1, 1], [], []>} : vector<8x8xf32>, vector<8x32xf32>, vector<8x32xf32> -> vector<8x32xf32>
    %53 = arith.addf %49, %52 : vector<8x32xf32>
    %54 = vector.broadcast %1 : vector<1x32xf32> to vector<8x32xf32>
    %55 = arith.addf %53, %54 : vector<8x32xf32>
    %cst_29 = arith.constant 0.000000e+00 : f32
    %56 = vector.broadcast %cst_29 : f32 to vector<8x32xf32>
    %57 = arith.maximumf %55, %56 : vector<8x32xf32>
    %c88 = arith.constant 88 : index
    %c0_30 = arith.constant 0 : index
    %58 = vector.load %arg2[%c88, %c0_30] : memref<144x32xf32, #tpu.memory_space<vmem>>, vector<32x16xf32>
    %cst_31 = arith.constant dense<0.000000e+00> : vector<8x16xf32>
    %59 = tpu.matmul %57, %58, %cst_31 {dimension_numbers = #tpu.dot_dimension_numbers<[1], [0], [0], [1], [0, 0, 1, 1], [], []>} : vector<8x32xf32>, vector<32x16xf32>, vector<8x16xf32> -> vector<8x16xf32>
    %60 = vector.broadcast %2 : vector<1x16xf32> to vector<8x16xf32>
    %61 = arith.addf %59, %60 : vector<8x16xf32>
    %cst_32 = arith.constant 0.000000e+00 : f32
    %62 = vector.broadcast %cst_32 : f32 to vector<8x16xf32>
    %63 = arith.maximumf %61, %62 : vector<8x16xf32>
    %c120 = arith.constant 120 : index
    %c0_33 = arith.constant 0 : index
    %64 = vector.load %arg2[%c120, %c0_33] : memref<144x32xf32, #tpu.memory_space<vmem>>, vector<16x4xf32>
    %cst_34 = arith.constant dense<0.000000e+00> : vector<8x4xf32>
    %65 = tpu.matmul %63, %64, %cst_34 {dimension_numbers = #tpu.dot_dimension_numbers<[1], [0], [0], [1], [0, 0, 1, 1], [], []>} : vector<8x16xf32>, vector<16x4xf32>, vector<8x4xf32> -> vector<8x4xf32>
    %66 = vector.broadcast %3 : vector<1x4xf32> to vector<8x4xf32>
    %67 = arith.addf %65, %66 : vector<8x4xf32>
    %c0_35 = arith.constant 0 : index
    %c0_36 = arith.constant 0 : index
    %68 = vector.load %arg3[%c0_35, %c0_36] : memref<8x4xf32, #tpu.memory_space<vmem>>, vector<8x4xf32>
    tpu.vector_store %arg3[%c0_35, %c0_36], %67 {strides = array<i32>} : memref<8x4xf32, #tpu.memory_space<vmem>>, vector<8x4xf32>,
    return
  }
}

</mosaic_0001>

<llo_original>
// kernel: tpu_custom_call.1
$region0: #{tpu_custom_call.1}
  #allocation0 [shape = 'u32[]', space=smem, size = 0x4, offset = 0x4, fixed_abs, tag = 'smem constant byte address 0x4 - core index']
  #allocation1 [shape = 'u32[144,128]{1,0:T(1,128)}', space=vmem, size = 0x12000, scoped, tag = 'internal scratch']
  %s0 = inlined_call_operand.vmem [shape: f32[64,16], index: 0, kind: input, shape index: {}]
  %s1 = inlined_call_operand.vmem [shape: f32[8,8], index: 1, kind: input, shape index: {}]
  %s2 = inlined_call_operand.vmem [shape: f32[144,32], index: 2, kind: input, shape index: {}]
  %s3 = inlined_call_operand.vmem [shape: f32[8,4], index: 3, kind: output, shape index: {}]
  %s4 = sld [smem:[#allocation0]]
  $region22: #{tpu_custom_call.1} parent=0
    _
  %s6 = ssub.s32 1, %s4
  %s7 = scalar_select 0, %s6, %s4
  // Predicated region
  $region2: #{tpu_custom_call.1} parent=0 // pred_check
    _
  $region3: #{tpu_custom_call.1} parent=0 // pred_check_branch
    %9 = sbr.rel (0) target = $region5
  $region4: #{tpu_custom_call.1} parent=0 // pred_region
    _
  $region5: #{tpu_custom_call.1} parent=0 // pred_fallthru
    _
  // Predicated region
  $region6: #{tpu_custom_call.1} parent=0 // pred_check
    _
  $region7: #{tpu_custom_call.1} parent=0 // pred_check_branch
    %11 = sbr.rel (0) target = $region9
  $region8: #{tpu_custom_call.1} parent=0 // pred_region
    _
  $region9: #{tpu_custom_call.1} parent=0 // pred_fallthru
    _
  // Predicated region
  $region10: #{tpu_custom_call.1} parent=0 // pred_check
    _
  $region11: #{tpu_custom_call.1} parent=0 // pred_check_branch
    %13 = sbr.rel (0) target = $region13
  $region12: #{tpu_custom_call.1} parent=0 // pred_region
    _
  $region13: #{tpu_custom_call.1} parent=0 // pred_fallthru
    _
  %v14 = vld [vmem:[%s2 + $0x88] sm:$0x1]
  %v15 = vld [vmem:[%s2 + $0x89] sm:$0x1]
  %v16 = vld [vmem:[%s2 + $0x8a] sm:$0x1]
  %v17 = vld [vmem:[%s2 + $0x8b] sm:$0x1]
  %v18 = vld [vmem:[%s0] sm:$0xff]
  %v19 = vld [vmem:[%s0 + $0x8] sm:$0xff]
  %v20 = vld [vmem:[%s0 + $0x10] sm:$0xff]
  %v21 = vld [vmem:[%s0 + $0x18] sm:$0xff]
  %v22 = vld [vmem:[%s0 + $0x20] sm:$0xff]
  %v23 = vld [vmem:[%s0 + $0x28] sm:$0xff]
  %v24 = vld [vmem:[%s0 + $0x30] sm:$0xff]
  %v25 = vld [vmem:[%s0 + $0x38] sm:$0xff]
  %v26 = vld [vmem:[%s2] sm:$0xff]
  %v27 = vld [vmem:[%s2 + $0x8] sm:$0xff]
  %v28 = vlaneseq
  %v29 = vshrl.u32 %v28, 7
  %v30 = vsub.s32 0, %v29
  %v31 = vrot.slane %v14, %v30
  %vm32 = vcmask 130048
  %v34 = vsel %vm32, %v18, 0
  %v37 = vsel %vm32, %v19, 0
  %v40 = vsel %vm32, %v20, 0
  %v43 = vsel %vm32, %v21, 0
  %v46 = vsel %vm32, %v22, 0
  %v49 = vsel %vm32, %v23, 0
  %v52 = vsel %vm32, %v24, 0
  %v55 = vsel %vm32, %v25, 0
  %57 = vmatprep.subr.mxu0 0.0
  %58 = vmatpush1.msra.mxu0 0.0
  %59 = vmatprep.subr.mxu0 0.0
  %60 = vmatpush1.msra.mxu0 0.0
  %61 = vmatprep.subr.mxu0 0.0
  %62 = vmatpush1.msra.mxu0 0.0
  %63 = vmatprep.subr.mxu0 0.0
  %64 = vmatpush1.msra.mxu0 0.0
  %65 = vmatprep.subr.mxu0 0.0
  %66 = vmatpush1.msra.mxu0 0.0
  %67 = vmatprep.subr.mxu0 0.0
  %68 = vmatpush1.msra.mxu0 0.0
  %69 = vmatprep.subr.mxu0 0.0
  %70 = vmatpush1.msra.mxu0 0.0
  %71 = vmatprep.subr.mxu0 0.0
  %72 = vmatpush1.msra.mxu0 0.0
  %73 = vmatprep.subr.mxu0 0.0
  %74 = vmatpush1.msra.mxu0 0.0
  %75 = vmatprep.subr.mxu0 0.0
  %76 = vmatpush1.msra.mxu0 0.0
  %77 = vmatprep.subr.mxu0 0.0
  %78 = vmatpush1.msra.mxu0 0.0
  %79 = vmatprep.subr.mxu0 0.0
  %80 = vmatpush1.msra.mxu0 0.0
  %81 = vmatprep.subr.mxu0 0.0
  %82 = vmatpush1.msra.mxu0 0.0
  %83 = vmatprep.subr.mxu0 0.0
  %84 = vmatpush1.msra.mxu0 0.0
  %85 = vmatprep.subr.mxu0 0.0
  %86 = vmatpush1.msra.mxu0 %v27
  %87 = vmatprep.subr.mxu0 0.0
  %88 = vmatpush1.msra.mxu0 %v26
  %89 = vmatprep.subr.mxu0 0.0
  %90 = vmatpush2.msra.mxu0 0.0
  %91 = vmatprep.subr.mxu0 0.0
  %92 = vmatpush2.msra.mxu0 0.0
  %93 = vmatprep.subr.mxu0 0.0
  %94 = vmatpush2.msra.mxu0 0.0
  %95 = vmatprep.subr.mxu0 0.0
  %96 = vmatpush2.msra.mxu0 0.0
  %97 = vmatprep.subr.mxu0 0.0
  %98 = vmatpush2.msra.mxu0 0.0
  %99 = vmatprep.subr.mxu0 0.0
  %100 = vmatpush2.msra.mxu0 0.0
  %101 = vmatprep.subr.mxu0 0.0
  %102 = vmatpush2.msra.mxu0 0.0
  %103 = vmatprep.subr.mxu0 0.0
  %104 = vmatpush2.msra.mxu0 0.0
  %105 = vmatprep.subr.mxu0 0.0
  %106 = vmatpush2.msra.mxu0 0.0
  %107 = vmatprep.subr.mxu0 0.0
  %108 = vmatpush2.msra.mxu0 0.0
  %109 = vmatprep.subr.mxu0 0.0
  %110 = vmatpush2.msra.mxu0 0.0
  %111 = vmatprep.subr.mxu0 0.0
  %112 = vmatpush2.msra.mxu0 0.0
  %113 = vmatprep.subr.mxu0 0.0
  %114 = vmatpush2.msra.mxu0 0.0
  %115 = vmatprep.subr.mxu0 0.0
  %116 = vmatpush2.msra.mxu0 0.0
  %117 = vmatprep.subr.mxu0 0.0
  %118 = vmatpush2.msra.mxu0 0.0
  %119 = vmatprep.subr.mxu0 0.0
  %120 = vmatpush2.msra.mxu0 0.0
  %121 = vmatprep.mubr.f32.mxu0 0.0
  %122 = vmatmul.mubr.f32.gmra.mxu0 %v34
  %v123 = vpop.f32.mrf.mxu0
  %v124 = vadd.f32 %v31, %v123
  %v125 = vpop.f32.mrf.mxu0
  %126 = vmatprep.mubr.f32.mxu0 0.0
  %127 = vmatmul.mubr.f32.gmra.mxu0 %v37
  %v128 = vpop.f32.mrf.mxu0
  %v129 = vadd.f32 %v31, %v128
  %v130 = vpop.f32.mrf.mxu0
  %131 = vmatprep.mubr.f32.mxu0 0.0
  %132 = vmatmul.mubr.f32.gmra.mxu0 %v40
  %v133 = vpop.f32.mrf.mxu0
  %v134 = vadd.f32 %v31, %v133
  %v135 = vpop.f32.mrf.mxu0
  %136 = vmatprep.mubr.f32.mxu0 0.0
  %137 = vmatmul.mubr.f32.gmra.mxu0 %v43
  %v138 = vpop.f32.mrf.mxu0
  %v139 = vadd.f32 %v31, %v138
  %v140 = vpop.f32.mrf.mxu0
  %141 = vmatprep.mubr.f32.mxu0 0.0
  %142 = vmatmul.mubr.f32.gmra.mxu0 %v46
  %v143 = vpop.f32.mrf.mxu0
  %v144 = vadd.f32 %v31, %v143
  %v145 = vpop.f32.mrf.mxu0
  %146 = vmatprep.mubr.f32.mxu0 0.0
  %147 = vmatmul.mubr.f32.gmra.mxu0 %v49
  %v148 = vpop.f32.mrf.mxu0
  %v149 = vadd.f32 %v31, %v148
  %v150 = vpop.f32.mrf.mxu0
  %151 = vmatprep.mubr.f32.mxu0 0.0
  %152 = vmatmul.mubr.f32.gmra.mxu0 %v52
  %v153 = vpop.f32.mrf.mxu0
  %v154 = vadd.f32 %v31, %v153
  %v155 = vpop.f32.mrf.mxu0
  %156 = vmatprep.mubr.f32.mxu0 0.0
  %157 = vmatmul.mubr.f32.gmra.mxu0 %v55
  %v158 = vpop.f32.mrf.mxu0
  %v159 = vadd.f32 %v31, %v158
  %v160 = vpop.f32.mrf.mxu0
  %161 = vdwg.mxu0
  %v162 = vld [vmem:[%s2 + $0x10] sm:$0xff]
  %v163 = vld [vmem:[%s2 + $0x18] sm:$0xff]
  %v164 = vld [vmem:[%s2 + $0x20] sm:$0xff]
  %v165 = vld [vmem:[%s2 + $0x28] sm:$0xff]
  %v166 = vmax.f32 %v124, 0.0
  %vm167 = vcmask 261120
  %v169 = vsel %vm167, %v166, 0
  %171 = vmatprep.subr.mxu0 0.0
  %172 = vmatpush1.msra.mxu0 0.0
  %173 = vmatprep.subr.mxu0 0.0
  %174 = vmatpush1.msra.mxu0 0.0
  %175 = vmatprep.subr.mxu0 0.0
  %176 = vmatpush1.msra.mxu0 0.0
  %177 = vmatprep.subr.mxu0 0.0
  %178 = vmatpush1.msra.mxu0 0.0
  %179 = vmatprep.subr.mxu0 0.0
  %180 = vmatpush1.msra.mxu0 0.0
  %181 = vmatprep.subr.mxu0 0.0
  %182 = vmatpush1.msra.mxu0 0.0
  %183 = vmatprep.subr.mxu0 0.0
  %184 = vmatpush1.msra.mxu0 0.0
  %185 = vmatprep.subr.mxu0 0.0
  %186 = vmatpush1.msra.mxu0 0.0
  %187 = vmatprep.subr.mxu0 0.0
  %188 = vmatpush1.msra.mxu0 0.0
  %189 = vmatprep.subr.mxu0 0.0
  %190 = vmatpush1.msra.mxu0 0.0
  %191 = vmatprep.subr.mxu0 0.0
  %192 = vmatpush1.msra.mxu0 0.0
  %193 = vmatprep.subr.mxu0 0.0
  %194 = vmatpush1.msra.mxu0 0.0
  %195 = vmatprep.subr.mxu0 0.0
  %196 = vmatpush1.msra.mxu0 %v165
  %197 = vmatprep.subr.mxu0 0.0
  %198 = vmatpush1.msra.mxu0 %v164
  %199 = vmatprep.subr.mxu0 0.0
  %200 = vmatpush1.msra.mxu0 %v163
  %201 = vmatprep.subr.mxu0 0.0
  %202 = vmatpush1.msra.mxu0 %v162
  %203 = vmatprep.subr.mxu0 0.0
  %204 = vmatpush2.msra.mxu0 0.0
  %205 = vmatprep.subr.mxu0 0.0
  %206 = vmatpush2.msra.mxu0 0.0
  %207 = vmatprep.subr.mxu0 0.0
  %208 = vmatpush2.msra.mxu0 0.0
  %209 = vmatprep.subr.mxu0 0.0
  %210 = vmatpush2.msra.mxu0 0.0
  %211 = vmatprep.subr.mxu0 0.0
  %212 = vmatpush2.msra.mxu0 0.0
  %213 = vmatprep.subr.mxu0 0.0
  %214 = vmatpush2.msra.mxu0 0.0
  %215 = vmatprep.subr.mxu0 0.0
  %216 = vmatpush2.msra.mxu0 0.0
  %217 = vmatprep.subr.mxu0 0.0
  %218 = vmatpush2.msra.mxu0 0.0
  %219 = vmatprep.subr.mxu0 0.0
  %220 = vmatpush2.msra.mxu0 0.0
  %221 = vmatprep.subr.mxu0 0.0
  %222 = vmatpush2.msra.mxu0 0.0
  %223 = vmatprep.subr.mxu0 0.0
  %224 = vmatpush2.msra.mxu0 0.0
  %225 = vmatprep.subr.mxu0 0.0
  %226 = vmatpush2.msra.mxu0 0.0
  %227 = vmatprep.subr.mxu0 0.0
  %228 = vmatpush2.msra.mxu0 0.0
  %229 = vmatprep.subr.mxu0 0.0
  %230 = vmatpush2.msra.mxu0 0.0
  %231 = vmatprep.subr.mxu0 0.0
  %232 = vmatpush2.msra.mxu0 0.0
  %233 = vmatprep.subr.mxu0 0.0
  %234 = vmatpush2.msra.mxu0 0.0
  %235 = vmatprep.mubr.f32.mxu0 0.0
  %236 = vmatmul.mubr.f32.gmra.mxu0 %v169
  %v237 = vpop.f32.mrf.mxu0
  %v238 = vadd.f32 0.0, %v237
  %v239 = vpop.f32.mrf.mxu0
  %240 = vdwg.mxu0
  %v241 = vadd.f32 %v129, %v238
  %v242 = vmax.f32 %v241, 0.0
  %v244 = vsel %vm167, %v242, 0
  %246 = vmatprep.subr.mxu0 0.0
  %247 = vmatpush1.msra.mxu0 0.0
  %248 = vmatprep.subr.mxu0 0.0
  %249 = vmatpush1.msra.mxu0 0.0
  %250 = vmatprep.subr.mxu0 0.0
  %251 = vmatpush1.msra.mxu0 0.0
  %252 = vmatprep.subr.mxu0 0.0
  %253 = vmatpush1.msra.mxu0 0.0
  %254 = vmatprep.subr.mxu0 0.0
  %255 = vmatpush1.msra.mxu0 0.0
  %256 = vmatprep.subr.mxu0 0.0
  %257 = vmatpush1.msra.mxu0 0.0
  %258 = vmatprep.subr.mxu0 0.0
  %259 = vmatpush1.msra.mxu0 0.0
  %260 = vmatprep.subr.mxu0 0.0
  %261 = vmatpush1.msra.mxu0 0.0
  %262 = vmatprep.subr.mxu0 0.0
  %263 = vmatpush1.msra.mxu0 0.0
  %264 = vmatprep.subr.mxu0 0.0
  %265 = vmatpush1.msra.mxu0 0.0
  %266 = vmatprep.subr.mxu0 0.0
  %267 = vmatpush1.msra.mxu0 0.0
  %268 = vmatprep.subr.mxu0 0.0
  %269 = vmatpush1.msra.mxu0 0.0
  %270 = vmatprep.subr.mxu0 0.0
  %271 = vmatpush1.msra.mxu0 %v165
  %272 = vmatprep.subr.mxu0 0.0
  %273 = vmatpush1.msra.mxu0 %v164
  %274 = vmatprep.subr.mxu0 0.0
  %275 = vmatpush1.msra.mxu0 %v163
  %276 = vmatprep.subr.mxu0 0.0
  %277 = vmatpush1.msra.mxu0 %v162
  %278 = vmatprep.subr.mxu0 0.0
  %279 = vmatpush2.msra.mxu0 0.0
  %280 = vmatprep.subr.mxu0 0.0
  %281 = vmatpush2.msra.mxu0 0.0
  %282 = vmatprep.subr.mxu0 0.0
  %283 = vmatpush2.msra.mxu0 0.0
  %284 = vmatprep.subr.mxu0 0.0
  %285 = vmatpush2.msra.mxu0 0.0
  %286 = vmatprep.subr.mxu0 0.0
  %287 = vmatpush2.msra.mxu0 0.0
  %288 = vmatprep.subr.mxu0 0.0
  %289 = vmatpush2.msra.mxu0 0.0
  %290 = vmatprep.subr.mxu0 0.0
  %291 = vmatpush2.msra.mxu0 0.0
  %292 = vmatprep.subr.mxu0 0.0
  %293 = vmatpush2.msra.mxu0 0.0
  %294 = vmatprep.subr.mxu0 0.0
  %295 = vmatpush2.msra.mxu0 0.0
  %296 = vmatprep.subr.mxu0 0.0
  %297 = vmatpush2.msra.mxu0 0.0
  %298 = vmatprep.subr.mxu0 0.0
  %299 = vmatpush2.msra.mxu0 0.0
  %300 = vmatprep.subr.mxu0 0.0
  %301 = vmatpush2.msra.mxu0 0.0
  %302 = vmatprep.subr.mxu0 0.0
  %303 = vmatpush2.msra.mxu0 0.0
  %304 = vmatprep.subr.mxu0 0.0
  %305 = vmatpush2.msra.mxu0 0.0
  %306 = vmatprep.subr.mxu0 0.0
  %307 = vmatpush2.msra.mxu0 0.0
  %308 = vmatprep.subr.mxu0 0.0
  %309 = vmatpush2.msra.mxu0 0.0
  %310 = vmatprep.mubr.f32.mxu0 0.0
  %311 = vmatmul.mubr.f32.gmra.mxu0 %v244
  %v312 = vpop.f32.mrf.mxu0
  %v313 = vadd.f32 0.0, %v312
  %v314 = vpop.f32.mrf.mxu0
  %315 = vdwg.mxu0
  %v316 = vadd.f32 %v134, %v313
  %v317 = vmax.f32 %v316, 0.0
  %v319 = vsel %vm167, %v317, 0
  %321 = vmatprep.subr.mxu0 0.0
  %322 = vmatpush1.msra.mxu0 0.0
  %323 = vmatprep.subr.mxu0 0.0
  %324 = vmatpush1.msra.mxu0 0.0
  %325 = vmatprep.subr.mxu0 0.0
  %326 = vmatpush1.msra.mxu0 0.0
  %327 = vmatprep.subr.mxu0 0.0
  %328 = vmatpush1.msra.mxu0 0.0
  %329 = vmatprep.subr.mxu0 0.0
  %330 = vmatpush1.msra.mxu0 0.0
  %331 = vmatprep.subr.mxu0 0.0
  %332 = vmatpush1.msra.mxu0 0.0
  %333 = vmatprep.subr.mxu0 0.0
  %334 = vmatpush1.msra.mxu0 0.0
  %335 = vmatprep.subr.mxu0 0.0
  %336 = vmatpush1.msra.mxu0 0.0
  %337 = vmatprep.subr.mxu0 0.0
  %338 = vmatpush1.msra.mxu0 0.0
  %339 = vmatprep.subr.mxu0 0.0
  %340 = vmatpush1.msra.mxu0 0.0
  %341 = vmatprep.subr.mxu0 0.0
  %342 = vmatpush1.msra.mxu0 0.0
  %343 = vmatprep.subr.mxu0 0.0
  %344 = vmatpush1.msra.mxu0 0.0
  %345 = vmatprep.subr.mxu0 0.0
  %346 = vmatpush1.msra.mxu0 %v165
  %347 = vmatprep.subr.mxu0 0.0
  %348 = vmatpush1.msra.mxu0 %v164
  %349 = vmatprep.subr.mxu0 0.0
  %350 = vmatpush1.msra.mxu0 %v163
  %351 = vmatprep.subr.mxu0 0.0
  %352 = vmatpush1.msra.mxu0 %v162
  %353 = vmatprep.subr.mxu0 0.0
  %354 = vmatpush2.msra.mxu0 0.0
  %355 = vmatprep.subr.mxu0 0.0
  %356 = vmatpush2.msra.mxu0 0.0
  %357 = vmatprep.subr.mxu0 0.0
  %358 = vmatpush2.msra.mxu0 0.0
  %359 = vmatprep.subr.mxu0 0.0
  %360 = vmatpush2.msra.mxu0 0.0
  %361 = vmatprep.subr.mxu0 0.0
  %362 = vmatpush2.msra.mxu0 0.0
  %363 = vmatprep.subr.mxu0 0.0
  %364 = vmatpush2.msra.mxu0 0.0
  %365 = vmatprep.subr.mxu0 0.0
  %366 = vmatpush2.msra.mxu0 0.0
  %367 = vmatprep.subr.mxu0 0.0
  %368 = vmatpush2.msra.mxu0 0.0
  %369 = vmatprep.subr.mxu0 0.0
  %370 = vmatpush2.msra.mxu0 0.0
  %371 = vmatprep.subr.mxu0 0.0
  %372 = vmatpush2.msra.mxu0 0.0
  %373 = vmatprep.subr.mxu0 0.0
  %374 = vmatpush2.msra.mxu0 0.0
  %375 = vmatprep.subr.mxu0 0.0
  %376 = vmatpush2.msra.mxu0 0.0
  %377 = vmatprep.subr.mxu0 0.0
  %378 = vmatpush2.msra.mxu0 0.0
  %379 = vmatprep.subr.mxu0 0.0
  %380 = vmatpush2.msra.mxu0 0.0
  %381 = vmatprep.subr.mxu0 0.0
  %382 = vmatpush2.msra.mxu0 0.0
  %383 = vmatprep.subr.mxu0 0.0
  %384 = vmatpush2.msra.mxu0 0.0
  %385 = vmatprep.mubr.f32.mxu0 0.0
  %386 = vmatmul.mubr.f32.gmra.mxu0 %v319
  %v387 = vpop.f32.mrf.mxu0
  %v388 = vadd.f32 0.0, %v387
  %v389 = vpop.f32.mrf.mxu0
  %390 = vdwg.mxu0
  %v391 = vadd.f32 %v139, %v388
  %v392 = vmax.f32 %v391, 0.0
  %v394 = vsel %vm167, %v392, 0
  %396 = vmatprep.subr.mxu0 0.0
  %397 = vmatpush1.msra.mxu0 0.0
  %398 = vmatprep.subr.mxu0 0.0
  %399 = vmatpush1.msra.mxu0 0.0
  %400 = vmatprep.subr.mxu0 0.0
  %401 = vmatpush1.msra.mxu0 0.0
  %402 = vmatprep.subr.mxu0 0.0
  %403 = vmatpush1.msra.mxu0 0.0
  %404 = vmatprep.subr.mxu0 0.0
  %405 = vmatpush1.msra.mxu0 0.0
  %406 = vmatprep.subr.mxu0 0.0
  %407 = vmatpush1.msra.mxu0 0.0
  %408 = vmatprep.subr.mxu0 0.0
  %409 = vmatpush1.msra.mxu0 0.0
  %410 = vmatprep.subr.mxu0 0.0
  %411 = vmatpush1.msra.mxu0 0.0
  %412 = vmatprep.subr.mxu0 0.0
  %413 = vmatpush1.msra.mxu0 0.0
  %414 = vmatprep.subr.mxu0 0.0
  %415 = vmatpush1.msra.mxu0 0.0
  %416 = vmatprep.subr.mxu0 0.0
  %417 = vmatpush1.msra.mxu0 0.0
  %418 = vmatprep.subr.mxu0 0.0
  %419 = vmatpush1.msra.mxu0 0.0
  %420 = vmatprep.subr.mxu0 0.0
  %421 = vmatpush1.msra.mxu0 %v165
  %422 = vmatprep.subr.mxu0 0.0
  %423 = vmatpush1.msra.mxu0 %v164
  %424 = vmatprep.subr.mxu0 0.0
  %425 = vmatpush1.msra.mxu0 %v163
  %426 = vmatprep.subr.mxu0 0.0
  %427 = vmatpush1.msra.mxu0 %v162
  %428 = vmatprep.subr.mxu0 0.0
  %429 = vmatpush2.msra.mxu0 0.0
  %430 = vmatprep.subr.mxu0 0.0
  %431 = vmatpush2.msra.mxu0 0.0
  %432 = vmatprep.subr.mxu0 0.0
  %433 = vmatpush2.msra.mxu0 0.0
  %434 = vmatprep.subr.mxu0 0.0
  %435 = vmatpush2.msra.mxu0 0.0
  %436 = vmatprep.subr.mxu0 0.0
  %437 = vmatpush2.msra.mxu0 0.0
  %438 = vmatprep.subr.mxu0 0.0
  %439 = vmatpush2.msra.mxu0 0.0
  %440 = vmatprep.subr.mxu0 0.0
  %441 = vmatpush2.msra.mxu0 0.0
  %442 = vmatprep.subr.mxu0 0.0
  %443 = vmatpush2.msra.mxu0 0.0
  %444 = vmatprep.subr.mxu0 0.0
  %445 = vmatpush2.msra.mxu0 0.0
  %446 = vmatprep.subr.mxu0 0.0
  %447 = vmatpush2.msra.mxu0 0.0
  %448 = vmatprep.subr.mxu0 0.0
  %449 = vmatpush2.msra.mxu0 0.0
  %450 = vmatprep.subr.mxu0 0.0
  %451 = vmatpush2.msra.mxu0 0.0
  %452 = vmatprep.subr.mxu0 0.0
  %453 = vmatpush2.msra.mxu0 0.0
  %454 = vmatprep.subr.mxu0 0.0
  %455 = vmatpush2.msra.mxu0 0.0
  %456 = vmatprep.subr.mxu0 0.0
  %457 = vmatpush2.msra.mxu0 0.0
  %458 = vmatprep.subr.mxu0 0.0
  %459 = vmatpush2.msra.mxu0 0.0
  %460 = vmatprep.mubr.f32.mxu0 0.0
  %461 = vmatmul.mubr.f32.gmra.mxu0 %v394
  %v462 = vpop.f32.mrf.mxu0
  %v463 = vadd.f32 0.0, %v462
  %v464 = vpop.f32.mrf.mxu0
  %465 = vdwg.mxu0
  %v466 = vadd.f32 %v144, %v463
  %v467 = vmax.f32 %v466, 0.0
  %v469 = vsel %vm167, %v467, 0
  %471 = vmatprep.subr.mxu0 0.0
  %472 = vmatpush1.msra.mxu0 0.0
  %473 = vmatprep.subr.mxu0 0.0
  %474 = vmatpush1.msra.mxu0 0.0
  %475 = vmatprep.subr.mxu0 0.0
  %476 = vmatpush1.msra.mxu0 0.0
  %477 = vmatprep.subr.mxu0 0.0
  %478 = vmatpush1.msra.mxu0 0.0
  %479 = vmatprep.subr.mxu0 0.0
  %480 = vmatpush1.msra.mxu0 0.0
  %481 = vmatprep.subr.mxu0 0.0
  %482 = vmatpush1.msra.mxu0 0.0
  %483 = vmatprep.subr.mxu0 0.0
  %484 = vmatpush1.msra.mxu0 0.0
  %485 = vmatprep.subr.mxu0 0.0
  %486 = vmatpush1.msra.mxu0 0.0
  %487 = vmatprep.subr.mxu0 0.0
  %488 = vmatpush1.msra.mxu0 0.0
  %489 = vmatprep.subr.mxu0 0.0
  %490 = vmatpush1.msra.mxu0 0.0
  %491 = vmatprep.subr.mxu0 0.0
  %492 = vmatpush1.msra.mxu0 0.0
  %493 = vmatprep.subr.mxu0 0.0
  %494 = vmatpush1.msra.mxu0 0.0
  %495 = vmatprep.subr.mxu0 0.0
  %496 = vmatpush1.msra.mxu0 %v165
  %497 = vmatprep.subr.mxu0 0.0
  %498 = vmatpush1.msra.mxu0 %v164
  %499 = vmatprep.subr.mxu0 0.0
  %500 = vmatpush1.msra.mxu0 %v163
  %501 = vmatprep.subr.mxu0 0.0
  %502 = vmatpush1.msra.mxu0 %v162
  %503 = vmatprep.subr.mxu0 0.0
  %504 = vmatpush2.msra.mxu0 0.0
  %505 = vmatprep.subr.mxu0 0.0
  %506 = vmatpush2.msra.mxu0 0.0
  %507 = vmatprep.subr.mxu0 0.0
  %508 = vmatpush2.msra.mxu0 0.0
  %509 = vmatprep.subr.mxu0 0.0
  %510 = vmatpush2.msra.mxu0 0.0
  %511 = vmatprep.subr.mxu0 0.0
  %512 = vmatpush2.msra.mxu0 0.0
  %513 = vmatprep.subr.mxu0 0.0
  %514 = vmatpush2.msra.mxu0 0.0
  %515 = vmatprep.subr.mxu0 0.0
  %516 = vmatpush2.msra.mxu0 0.0
  %517 = vmatprep.subr.mxu0 0.0
  %518 = vmatpush2.msra.mxu0 0.0
  %519 = vmatprep.subr.mxu0 0.0
  %520 = vmatpush2.msra.mxu0 0.0
  %521 = vmatprep.subr.mxu0 0.0
  %522 = vmatpush2.msra.mxu0 0.0
  %523 = vmatprep.subr.mxu0 0.0
  %524 = vmatpush2.msra.mxu0 0.0
  %525 = vmatprep.subr.mxu0 0.0
  %526 = vmatpush2.msra.mxu0 0.0
  %527 = vmatprep.subr.mxu0 0.0
  %528 = vmatpush2.msra.mxu0 0.0
  %529 = vmatprep.subr.mxu0 0.0
  %530 = vmatpush2.msra.mxu0 0.0
  %531 = vmatprep.subr.mxu0 0.0
  %532 = vmatpush2.msra.mxu0 0.0
  %533 = vmatprep.subr.mxu0 0.0
  %534 = vmatpush2.msra.mxu0 0.0
  %535 = vmatprep.mubr.f32.mxu0 0.0
  %536 = vmatmul.mubr.f32.gmra.mxu0 %v469
  %v537 = vpop.f32.mrf.mxu0
  %v538 = vadd.f32 0.0, %v537
  %v539 = vpop.f32.mrf.mxu0
  %540 = vdwg.mxu0
  %v541 = vadd.f32 %v149, %v538
  %v542 = vmax.f32 %v541, 0.0
  %v544 = vsel %vm167, %v542, 0
  %546 = vmatprep.subr.mxu0 0.0
  %547 = vmatpush1.msra.mxu0 0.0
  %548 = vmatprep.subr.mxu0 0.0
  %549 = vmatpush1.msra.mxu0 0.0
  %550 = vmatprep.subr.mxu0 0.0
  %551 = vmatpush1.msra.mxu0 0.0
  %552 = vmatprep.subr.mxu0 0.0
  %553 = vmatpush1.msra.mxu0 0.0
  %554 = vmatprep.subr.mxu0 0.0
  %555 = vmatpush1.msra.mxu0 0.0
  %556 = vmatprep.subr.mxu0 0.0
  %557 = vmatpush1.msra.mxu0 0.0
  %558 = vmatprep.subr.mxu0 0.0
  %559 = vmatpush1.msra.mxu0 0.0
  %560 = vmatprep.subr.mxu0 0.0
  %561 = vmatpush1.msra.mxu0 0.0
  %562 = vmatprep.subr.mxu0 0.0
  %563 = vmatpush1.msra.mxu0 0.0
  %564 = vmatprep.subr.mxu0 0.0
  %565 = vmatpush1.msra.mxu0 0.0
  %566 = vmatprep.subr.mxu0 0.0
  %567 = vmatpush1.msra.mxu0 0.0
  %568 = vmatprep.subr.mxu0 0.0
  %569 = vmatpush1.msra.mxu0 0.0
  %570 = vmatprep.subr.mxu0 0.0
  %571 = vmatpush1.msra.mxu0 %v165
  %572 = vmatprep.subr.mxu0 0.0
  %573 = vmatpush1.msra.mxu0 %v164
  %574 = vmatprep.subr.mxu0 0.0
  %575 = vmatpush1.msra.mxu0 %v163
  %576 = vmatprep.subr.mxu0 0.0
  %577 = vmatpush1.msra.mxu0 %v162
  %578 = vmatprep.subr.mxu0 0.0
  %579 = vmatpush2.msra.mxu0 0.0
  %580 = vmatprep.subr.mxu0 0.0
  %581 = vmatpush2.msra.mxu0 0.0
  %582 = vmatprep.subr.mxu0 0.0
  %583 = vmatpush2.msra.mxu0 0.0
  %584 = vmatprep.subr.mxu0 0.0
  %585 = vmatpush2.msra.mxu0 0.0
  %586 = vmatprep.subr.mxu0 0.0
  %587 = vmatpush2.msra.mxu0 0.0
  %588 = vmatprep.subr.mxu0 0.0
  %589 = vmatpush2.msra.mxu0 0.0
  %590 = vmatprep.subr.mxu0 0.0
  %591 = vmatpush2.msra.mxu0 0.0
  %592 = vmatprep.subr.mxu0 0.0
  %593 = vmatpush2.msra.mxu0 0.0
  %594 = vmatprep.subr.mxu0 0.0
  %595 = vmatpush2.msra.mxu0 0.0
  %596 = vmatprep.subr.mxu0 0.0
  %597 = vmatpush2.msra.mxu0 0.0
  %598 = vmatprep.subr.mxu0 0.0
  %599 = vmatpush2.msra.mxu0 0.0
  %600 = vmatprep.subr.mxu0 0.0
  %601 = vmatpush2.msra.mxu0 0.0
  %602 = vmatprep.subr.mxu0 0.0
  %603 = vmatpush2.msra.mxu0 0.0
  %604 = vmatprep.subr.mxu0 0.0
  %605 = vmatpush2.msra.mxu0 0.0
  %606 = vmatprep.subr.mxu0 0.0
  %607 = vmatpush2.msra.mxu0 0.0
  %608 = vmatprep.subr.mxu0 0.0
  %609 = vmatpush2.msra.mxu0 0.0
  %610 = vmatprep.mubr.f32.mxu0 0.0
  %611 = vmatmul.mubr.f32.gmra.mxu0 %v544
  %v612 = vpop.f32.mrf.mxu0
  %v613 = vadd.f32 0.0, %v612
  %v614 = vpop.f32.mrf.mxu0
  %615 = vdwg.mxu0
  %v616 = vadd.f32 %v154, %v613
  %v617 = vmax.f32 %v616, 0.0
  %v619 = vsel %vm167, %v617, 0
  %621 = vmatprep.subr.mxu0 0.0
  %622 = vmatpush1.msra.mxu0 0.0
  %623 = vmatprep.subr.mxu0 0.0
  %624 = vmatpush1.msra.mxu0 0.0
  %625 = vmatprep.subr.mxu0 0.0
  %626 = vmatpush1.msra.mxu0 0.0
  %627 = vmatprep.subr.mxu0 0.0
  %628 = vmatpush1.msra.mxu0 0.0
  %629 = vmatprep.subr.mxu0 0.0
  %630 = vmatpush1.msra.mxu0 0.0
  %631 = vmatprep.subr.mxu0 0.0
  %632 = vmatpush1.msra.mxu0 0.0
  %633 = vmatprep.subr.mxu0 0.0
  %634 = vmatpush1.msra.mxu0 0.0
  %635 = vmatprep.subr.mxu0 0.0
  %636 = vmatpush1.msra.mxu0 0.0
  %637 = vmatprep.subr.mxu0 0.0
  %638 = vmatpush1.msra.mxu0 0.0
  %639 = vmatprep.subr.mxu0 0.0
  %640 = vmatpush1.msra.mxu0 0.0
  %641 = vmatprep.subr.mxu0 0.0
  %642 = vmatpush1.msra.mxu0 0.0
  %643 = vmatprep.subr.mxu0 0.0
  %644 = vmatpush1.msra.mxu0 0.0
  %645 = vmatprep.subr.mxu0 0.0
  %646 = vmatpush1.msra.mxu0 %v165
  %647 = vmatprep.subr.mxu0 0.0
  %648 = vmatpush1.msra.mxu0 %v164
  %649 = vmatprep.subr.mxu0 0.0
  %650 = vmatpush1.msra.mxu0 %v163
  %651 = vmatprep.subr.mxu0 0.0
  %652 = vmatpush1.msra.mxu0 %v162
  %653 = vmatprep.subr.mxu0 0.0
  %654 = vmatpush2.msra.mxu0 0.0
  %655 = vmatprep.subr.mxu0 0.0
  %656 = vmatpush2.msra.mxu0 0.0
  %657 = vmatprep.subr.mxu0 0.0
  %658 = vmatpush2.msra.mxu0 0.0
  %659 = vmatprep.subr.mxu0 0.0
  %660 = vmatpush2.msra.mxu0 0.0
  %661 = vmatprep.subr.mxu0 0.0
  %662 = vmatpush2.msra.mxu0 0.0
  %663 = vmatprep.subr.mxu0 0.0
  %664 = vmatpush2.msra.mxu0 0.0
  %665 = vmatprep.subr.mxu0 0.0
  %666 = vmatpush2.msra.mxu0 0.0
  %667 = vmatprep.subr.mxu0 0.0
  %668 = vmatpush2.msra.mxu0 0.0
  %669 = vmatprep.subr.mxu0 0.0
  %670 = vmatpush2.msra.mxu0 0.0
  %671 = vmatprep.subr.mxu0 0.0
  %672 = vmatpush2.msra.mxu0 0.0
  %673 = vmatprep.subr.mxu0 0.0
  %674 = vmatpush2.msra.mxu0 0.0
  %675 = vmatprep.subr.mxu0 0.0
  %676 = vmatpush2.msra.mxu0 0.0
  %677 = vmatprep.subr.mxu0 0.0
  %678 = vmatpush2.msra.mxu0 0.0
  %679 = vmatprep.subr.mxu0 0.0
  %680 = vmatpush2.msra.mxu0 0.0
  %681 = vmatprep.subr.mxu0 0.0
  %682 = vmatpush2.msra.mxu0 0.0
  %683 = vmatprep.subr.mxu0 0.0
  %684 = vmatpush2.msra.mxu0 0.0
  %685 = vmatprep.mubr.f32.mxu0 0.0
  %686 = vmatmul.mubr.f32.gmra.mxu0 %v619
  %v687 = vpop.f32.mrf.mxu0
  %v688 = vadd.f32 0.0, %v687
  %v689 = vpop.f32.mrf.mxu0
  %690 = vdwg.mxu0
  %v691 = vadd.f32 %v159, %v688
  %v692 = vmax.f32 %v691, 0.0
  %v693 = vld [vmem:[%s2 + $0x30] sm:$0xff]
  %v694 = vld [vmem:[%s2 + $0x38] sm:$0xff]
  %v695 = vld [vmem:[%s2 + $0x40] sm:$0xff]
  %v696 = vld [vmem:[%s2 + $0x48] sm:$0xff]
  %v697 = vld [vmem:[%s1] sm:$0xff]
  %v698 = vld [vmem:[%s2 + $0x50] sm:$0xff]
  %vm699 = vcmask 64512
  %v701 = vsel %vm699, %v697, 0
  %703 = vmatprep.subr.mxu0 0.0
  %704 = vmatpush1.msra.mxu0 0.0
  %705 = vmatprep.subr.mxu0 0.0
  %706 = vmatpush1.msra.mxu0 0.0
  %707 = vmatprep.subr.mxu0 0.0
  %708 = vmatpush1.msra.mxu0 0.0
  %709 = vmatprep.subr.mxu0 0.0
  %710 = vmatpush1.msra.mxu0 0.0
  %711 = vmatprep.subr.mxu0 0.0
  %712 = vmatpush1.msra.mxu0 0.0
  %713 = vmatprep.subr.mxu0 0.0
  %714 = vmatpush1.msra.mxu0 0.0
  %715 = vmatprep.subr.mxu0 0.0
  %716 = vmatpush1.msra.mxu0 0.0
  %717 = vmatprep.subr.mxu0 0.0
  %718 = vmatpush1.msra.mxu0 0.0
  %719 = vmatprep.subr.mxu0 0.0
  %720 = vmatpush1.msra.mxu0 0.0
  %721 = vmatprep.subr.mxu0 0.0
  %722 = vmatpush1.msra.mxu0 0.0
  %723 = vmatprep.subr.mxu0 0.0
  %724 = vmatpush1.msra.mxu0 0.0
  %725 = vmatprep.subr.mxu0 0.0
  %726 = vmatpush1.msra.mxu0 0.0
  %727 = vmatprep.subr.mxu0 0.0
  %728 = vmatpush1.msra.mxu0 0.0
  %729 = vmatprep.subr.mxu0 0.0
  %730 = vmatpush1.msra.mxu0 0.0
  %731 = vmatprep.subr.mxu0 0.0
  %732 = vmatpush1.msra.mxu0 0.0
  %733 = vmatprep.subr.mxu0 0.0
  %734 = vmatpush1.msra.mxu0 %v698
  %735 = vmatprep.subr.mxu0 0.0
  %736 = vmatpush2.msra.mxu0 0.0
  %737 = vmatprep.subr.mxu0 0.0
  %738 = vmatpush2.msra.mxu0 0.0
  %739 = vmatprep.subr.mxu0 0.0
  %740 = vmatpush2.msra.mxu0 0.0
  %741 = vmatprep.subr.mxu0 0.0
  %742 = vmatpush2.msra.mxu0 0.0
  %743 = vmatprep.subr.mxu0 0.0
  %744 = vmatpush2.msra.mxu0 0.0
  %745 = vmatprep.subr.mxu0 0.0
  %746 = vmatpush2.msra.mxu0 0.0
  %747 = vmatprep.subr.mxu0 0.0
  %748 = vmatpush2.msra.mxu0 0.0
  %749 = vmatprep.subr.mxu0 0.0
  %750 = vmatpush2.msra.mxu0 0.0
  %751 = vmatprep.subr.mxu0 0.0
  %752 = vmatpush2.msra.mxu0 0.0
  %753 = vmatprep.subr.mxu0 0.0
  %754 = vmatpush2.msra.mxu0 0.0
  %755 = vmatprep.subr.mxu0 0.0
  %756 = vmatpush2.msra.mxu0 0.0
  %757 = vmatprep.subr.mxu0 0.0
  %758 = vmatpush2.msra.mxu0 0.0
  %759 = vmatprep.subr.mxu0 0.0
  %760 = vmatpush2.msra.mxu0 0.0
  %761 = vmatprep.subr.mxu0 0.0
  %762 = vmatpush2.msra.mxu0 0.0
  %763 = vmatprep.subr.mxu0 0.0
  %764 = vmatpush2.msra.mxu0 0.0
  %765 = vmatprep.subr.mxu0 0.0
  %766 = vmatpush2.msra.mxu0 0.0
  %767 = vmatprep.mubr.f32.mxu0 0.0
  %768 = vmatmul.mubr.f32.gmra.mxu0 %v701
  %v769 = vpop.f32.mrf.mxu0
  %v770 = vadd.f32 0.0, %v769
  %v771 = vpop.f32.mrf.mxu0
  %772 = vdwg.mxu0
  %v774 = vsel %vm167, %v692, 0
  %776 = vmatprep.subr.mxu0 0.0
  %777 = vmatpush1.msra.mxu0 0.0
  %778 = vmatprep.subr.mxu0 0.0
  %779 = vmatpush1.msra.mxu0 0.0
  %780 = vmatprep.subr.mxu0 0.0
  %781 = vmatpush1.msra.mxu0 0.0
  %782 = vmatprep.subr.mxu0 0.0
  %783 = vmatpush1.msra.mxu0 0.0
  %784 = vmatprep.subr.mxu0 0.0
  %785 = vmatpush1.msra.mxu0 0.0
  %786 = vmatprep.subr.mxu0 0.0
  %787 = vmatpush1.msra.mxu0 0.0
  %788 = vmatprep.subr.mxu0 0.0
  %789 = vmatpush1.msra.mxu0 0.0
  %790 = vmatprep.subr.mxu0 0.0
  %791 = vmatpush1.msra.mxu0 0.0
  %792 = vmatprep.subr.mxu0 0.0
  %793 = vmatpush1.msra.mxu0 0.0
  %794 = vmatprep.subr.mxu0 0.0
  %795 = vmatpush1.msra.mxu0 0.0
  %796 = vmatprep.subr.mxu0 0.0
  %797 = vmatpush1.msra.mxu0 0.0
  %798 = vmatprep.subr.mxu0 0.0
  %799 = vmatpush1.msra.mxu0 0.0
  %800 = vmatprep.subr.mxu0 0.0
  %801 = vmatpush1.msra.mxu0 %v696
  %802 = vmatprep.subr.mxu0 0.0
  %803 = vmatpush1.msra.mxu0 %v695
  %804 = vmatprep.subr.mxu0 0.0
  %805 = vmatpush1.msra.mxu0 %v694
  %806 = vmatprep.subr.mxu0 0.0
  %807 = vmatpush1.msra.mxu0 %v693
  %808 = vmatprep.subr.mxu0 0.0
  %809 = vmatpush2.msra.mxu0 0.0
  %810 = vmatprep.subr.mxu0 0.0
  %811 = vmatpush2.msra.mxu0 0.0
  %812 = vmatprep.subr.mxu0 0.0
  %813 = vmatpush2.msra.mxu0 0.0
  %814 = vmatprep.subr.mxu0 0.0
  %815 = vmatpush2.msra.mxu0 0.0
  %816 = vmatprep.subr.mxu0 0.0
  %817 = vmatpush2.msra.mxu0 0.0
  %818 = vmatprep.subr.mxu0 0.0
  %819 = vmatpush2.msra.mxu0 0.0
  %820 = vmatprep.subr.mxu0 0.0
  %821 = vmatpush2.msra.mxu0 0.0
  %822 = vmatprep.subr.mxu0 0.0
  %823 = vmatpush2.msra.mxu0 0.0
  %824 = vmatprep.subr.mxu0 0.0
  %825 = vmatpush2.msra.mxu0 0.0
  %826 = vmatprep.subr.mxu0 0.0
  %827 = vmatpush2.msra.mxu0 0.0
  %828 = vmatprep.subr.mxu0 0.0
  %829 = vmatpush2.msra.mxu0 0.0
  %830 = vmatprep.subr.mxu0 0.0
  %831 = vmatpush2.msra.mxu0 0.0
  %832 = vmatprep.subr.mxu0 0.0
  %833 = vmatpush2.msra.mxu0 0.0
  %834 = vmatprep.subr.mxu0 0.0
  %835 = vmatpush2.msra.mxu0 0.0
  %836 = vmatprep.subr.mxu0 0.0
  %837 = vmatpush2.msra.mxu0 0.0
  %838 = vmatprep.subr.mxu0 0.0
  %839 = vmatpush2.msra.mxu0 0.0
  %840 = vmatprep.mubr.f32.mxu0 0.0
  %841 = vmatmul.mubr.f32.gmra.mxu0 %v774
  %v842 = vpop.f32.mrf.mxu0
  %v843 = vadd.f32 %v770, %v842
  %v844 = vpop.f32.mrf.mxu0
  %845 = vdwg.mxu0
  %v846 = vlaneseq
  %v847 = vshrl.u32 %v846, 7
  %v848 = vsub.s32 0, %v847
  %v849 = vrot.slane %v15, %v848
  %v850 = vadd.f32 %v843, %v849
  %v851 = vmax.f32 %v850, 0.0
  %v852 = vld [vmem:[%s2 + $0x58] sm:$0xff]
  %v853 = vld [vmem:[%s2 + $0x60] sm:$0xff]
  %v854 = vld [vmem:[%s2 + $0x68] sm:$0xff]
  %v855 = vld [vmem:[%s2 + $0x70] sm:$0xff]
  %v856 = vlaneseq
  %v857 = vshrl.u32 %v856, 7
  %v858 = vsub.s32 0, %v857
  %v859 = vrot.slane %v16, %v858
  %v861 = vsel %vm167, %v851, 0
  %863 = vmatprep.subr.mxu0 0.0
  %864 = vmatpush1.msra.mxu0 0.0
  %865 = vmatprep.subr.mxu0 0.0
  %866 = vmatpush1.msra.mxu0 0.0
  %867 = vmatprep.subr.mxu0 0.0
  %868 = vmatpush1.msra.mxu0 0.0
  %869 = vmatprep.subr.mxu0 0.0
  %870 = vmatpush1.msra.mxu0 0.0
  %871 = vmatprep.subr.mxu0 0.0
  %872 = vmatpush1.msra.mxu0 0.0
  %873 = vmatprep.subr.mxu0 0.0
  %874 = vmatpush1.msra.mxu0 0.0
  %875 = vmatprep.subr.mxu0 0.0
  %876 = vmatpush1.msra.mxu0 0.0
  %877 = vmatprep.subr.mxu0 0.0
  %878 = vmatpush1.msra.mxu0 0.0
  %879 = vmatprep.subr.mxu0 0.0
  %880 = vmatpush1.msra.mxu0 0.0
  %881 = vmatprep.subr.mxu0 0.0
  %882 = vmatpush1.msra.mxu0 0.0
  %883 = vmatprep.subr.mxu0 0.0
  %884 = vmatpush1.msra.mxu0 0.0
  %885 = vmatprep.subr.mxu0 0.0
  %886 = vmatpush1.msra.mxu0 0.0
  %887 = vmatprep.subr.mxu0 0.0
  %888 = vmatpush1.msra.mxu0 %v855
  %889 = vmatprep.subr.mxu0 0.0
  %890 = vmatpush1.msra.mxu0 %v854
  %891 = vmatprep.subr.mxu0 0.0
  %892 = vmatpush1.msra.mxu0 %v853
  %893 = vmatprep.subr.mxu0 0.0
  %894 = vmatpush1.msra.mxu0 %v852
  %895 = vmatprep.subr.mxu0 0.0
  %896 = vmatpush2.msra.mxu0 0.0
  %897 = vmatprep.subr.mxu0 0.0
  %898 = vmatpush2.msra.mxu0 0.0
  %899 = vmatprep.subr.mxu0 0.0
  %900 = vmatpush2.msra.mxu0 0.0
  %901 = vmatprep.subr.mxu0 0.0
  %902 = vmatpush2.msra.mxu0 0.0
  %903 = vmatprep.subr.mxu0 0.0
  %904 = vmatpush2.msra.mxu0 0.0
  %905 = vmatprep.subr.mxu0 0.0
  %906 = vmatpush2.msra.mxu0 0.0
  %907 = vmatprep.subr.mxu0 0.0
  %908 = vmatpush2.msra.mxu0 0.0
  %909 = vmatprep.subr.mxu0 0.0
  %910 = vmatpush2.msra.mxu0 0.0
  %911 = vmatprep.subr.mxu0 0.0
  %912 = vmatpush2.msra.mxu0 0.0
  %913 = vmatprep.subr.mxu0 0.0
  %914 = vmatpush2.msra.mxu0 0.0
  %915 = vmatprep.subr.mxu0 0.0
  %916 = vmatpush2.msra.mxu0 0.0
  %917 = vmatprep.subr.mxu0 0.0
  %918 = vmatpush2.msra.mxu0 0.0
  %919 = vmatprep.subr.mxu0 0.0
  %920 = vmatpush2.msra.mxu0 0.0
  %921 = vmatprep.subr.mxu0 0.0
  %922 = vmatpush2.msra.mxu0 0.0
  %923 = vmatprep.subr.mxu0 0.0
  %924 = vmatpush2.msra.mxu0 0.0
  %925 = vmatprep.subr.mxu0 0.0
  %926 = vmatpush2.msra.mxu0 0.0
  %927 = vmatprep.mubr.f32.mxu0 0.0
  %928 = vmatmul.mubr.f32.gmra.mxu0 %v861
  %v929 = vpop.f32.mrf.mxu0
  %v930 = vadd.f32 %v859, %v929
  %v931 = vpop.f32.mrf.mxu0
  %932 = vdwg.mxu0
  %v933 = vmax.f32 %v930, 0.0
  %v934 = vld [vmem:[%s2 + $0x78] sm:$0xff]
  %v935 = vld [vmem:[%s2 + $0x80] sm:$0xff]
  %v936 = vlaneseq
  %v937 = vshrl.u32 %v936, 7
  %v938 = vsub.s32 0, %v937
  %v939 = vrot.slane %v17, %v938
  %v941 = vsel %vm32, %v933, 0
  %943 = vmatprep.subr.mxu0 0.0
  %944 = vmatpush1.msra.mxu0 0.0
  %945 = vmatprep.subr.mxu0 0.0
  %946 = vmatpush1.msra.mxu0 0.0
  %947 = vmatprep.subr.mxu0 0.0
  %948 = vmatpush1.msra.mxu0 0.0
  %949 = vmatprep.subr.mxu0 0.0
  %950 = vmatpush1.msra.mxu0 0.0
  %951 = vmatprep.subr.mxu0 0.0
  %952 = vmatpush1.msra.mxu0 0.0
  %953 = vmatprep.subr.mxu0 0.0
  %954 = vmatpush1.msra.mxu0 0.0
  %955 = vmatprep.subr.mxu0 0.0
  %956 = vmatpush1.msra.mxu0 0.0
  %957 = vmatprep.subr.mxu0 0.0
  %958 = vmatpush1.msra.mxu0 0.0
  %959 = vmatprep.subr.mxu0 0.0
  %960 = vmatpush1.msra.mxu0 0.0
  %961 = vmatprep.subr.mxu0 0.0
  %962 = vmatpush1.msra.mxu0 0.0
  %963 = vmatprep.subr.mxu0 0.0
  %964 = vmatpush1.msra.mxu0 0.0
  %965 = vmatprep.subr.mxu0 0.0
  %966 = vmatpush1.msra.mxu0 0.0
  %967 = vmatprep.subr.mxu0 0.0
  %968 = vmatpush1.msra.mxu0 0.0
  %969 = vmatprep.subr.mxu0 0.0
  %970 = vmatpush1.msra.mxu0 0.0
  %971 = vmatprep.subr.mxu0 0.0
  %972 = vmatpush1.msra.mxu0 %v935
  %973 = vmatprep.subr.mxu0 0.0
  %974 = vmatpush1.msra.mxu0 %v934
  %975 = vmatprep.subr.mxu0 0.0
  %976 = vmatpush2.msra.mxu0 0.0
  %977 = vmatprep.subr.mxu0 0.0
  %978 = vmatpush2.msra.mxu0 0.0
  %979 = vmatprep.subr.mxu0 0.0
  %980 = vmatpush2.msra.mxu0 0.0
  %981 = vmatprep.subr.mxu0 0.0
  %982 = vmatpush2.msra.mxu0 0.0
  %983 = vmatprep.subr.mxu0 0.0
  %984 = vmatpush2.msra.mxu0 0.0
  %985 = vmatprep.subr.mxu0 0.0
  %986 = vmatpush2.msra.mxu0 0.0
  %987 = vmatprep.subr.mxu0 0.0
  %988 = vmatpush2.msra.mxu0 0.0
  %989 = vmatprep.subr.mxu0 0.0
  %990 = vmatpush2.msra.mxu0 0.0
  %991 = vmatprep.subr.mxu0 0.0
  %992 = vmatpush2.msra.mxu0 0.0
  %993 = vmatprep.subr.mxu0 0.0
  %994 = vmatpush2.msra.mxu0 0.0
  %995 = vmatprep.subr.mxu0 0.0
  %996 = vmatpush2.msra.mxu0 0.0
  %997 = vmatprep.subr.mxu0 0.0
  %998 = vmatpush2.msra.mxu0 0.0
  %999 = vmatprep.subr.mxu0 0.0
  %1000 = vmatpush2.msra.mxu0 0.0
  %1001 = vmatprep.subr.mxu0 0.0
  %1002 = vmatpush2.msra.mxu0 0.0
  %1003 = vmatprep.subr.mxu0 0.0
  %1004 = vmatpush2.msra.mxu0 0.0
  %1005 = vmatprep.subr.mxu0 0.0
  %1006 = vmatpush2.msra.mxu0 0.0
  %1007 = vmatprep.mubr.f32.mxu0 0.0
  %1008 = vmatmul.mubr.f32.gmra.mxu0 %v941
  %v1009 = vpop.f32.mrf.mxu0
  %v1010 = vadd.f32 %v939, %v1009
  %v1011 = vpop.f32.mrf.mxu0
  %1012 = vdwg.mxu0
  %vm1013 = vcmask 31744
  %1014 = vst.msk [vmem:[%s3] sm:$0xff] %vm1013, %v1010
  // Predicated region
  $region14: #{tpu_custom_call.1} parent=0 // pred_check
    _
  $region15: #{tpu_custom_call.1} parent=0 // pred_check_branch
    %1016 = sbr.rel (0) target = $region17
  $region16: #{tpu_custom_call.1} parent=0 // pred_region
    _
  $region17: #{tpu_custom_call.1} parent=0 // pred_fallthru
    _
  // Predicated region
  $region18: #{tpu_custom_call.1} parent=0 // pred_check
    _
  $region19: #{tpu_custom_call.1} parent=0 // pred_check_branch
    %1018 = sbr.rel (0) target = $region21
  $region20: #{tpu_custom_call.1} parent=0 // pred_region
    _
  $region21: #{tpu_custom_call.1} parent=0 // pred_fallthru
    _

</llo_original>
